<compile_context>
chip_gen: v7x
topology: tpu7x:2x2x1
jax: 0.10.0
libtpu: 0.0.40
codegen_flags: <defaults>
</compile_context>

<pallas_src>
import math

import jax
import jax.numpy as jnp
from jax.experimental import pallas as pl
from jax.experimental.pallas import tpu as pltpu

LANE = 128


# ----------------------------- index helpers --------------------------------
def lm1d(l, m):
    return m + l * (l + 1) // 2


# --------------------- precompute alm / blm (Python floats) -----------------
def precompute_ab(lmax):
    alm = [0.0]
    blm = [0.0]
    for i in range(1, lmax + 1):
        l = float(i)
        lsq = l * l
        ld = 2.0 * l
        l1 = 4.0 * lsq - 1.0
        l2 = lsq - ld + 1.0
        for j in range(0, i + 1):
            m = float(j)
            msq = m * m
            if i == j:
                alm.append(-math.sqrt(1.0 + 0.5 / m))
                blm.append(0.0)
            else:
                alm.append(math.sqrt(l1 / (lsq - msq)))
                blm.append(-math.sqrt((l2 - msq) / (4.0 * l2 - 1.0)))
    return alm, blm


# ---------------- shared math: yields (row, real, imag) per channel ----------
def _ylm_channels(rx, ry, rz, lmax, alm, blm):
    """Yields (row, real, imag) for every (l, m) channel, row = l*(l+1)+m.

    Values that are point-independent constants are yielded as Python floats.
    The Condon-Shortley phase and the negative-m conjugate are folded in.
    """
    pi = math.pi
    x = rz

    # Normalized associated-Legendre recurrence (matches the module).
    plm = {(0, 0): math.sqrt(1.0 / (4.0 * pi))}
    if lmax > 0:
        plm[(1, 0)] = math.sqrt(3.0 / (4.0 * pi)) * x
        plm[(1, 1)] = -math.sqrt(3.0 / (8.0 * pi))          # constant (no x)
        for l in range(2, lmax + 1):
            for m in range(0, l + 1):
                if m == l:
                    plm[(l, m)] = alm[lm1d(l, l)] * plm[(l - 1, l - 1)]
                elif m == l - 1:
                    plm[(l, m)] = (math.sqrt(2.0 * m + 3.0) * plm[(l - 1, l - 1)]) * x
                else:
                    plm[(l, m)] = alm[lm1d(l, m)] * (
                        x * plm[(l - 1, m)] + blm[lm1d(l, m)] * plm[(l - 2, m)]
                    )

    # m = 0: purely real channels.
    for l in range(0, lmax + 1):
        yield l * (l + 1), plm[(l, 0)], 0.0

    # m >= 1: azimuthal phase (rx + i*ry)^m built incrementally.
    pm_r, pm_i = rx, ry
    for m in range(1, lmax + 1):
        if m >= 2:
            pr_tmp = pm_r
            pm_r = pm_r * rx - pm_i * ry
            pm_i = pr_tmp * ry + pm_i * rx
        for l in range(m, lmax + 1):
            vr = pm_r * plm[(l, m)]
            vi = pm_i * plm[(l, m)]
            base = l * (l + 1)
            yield base + m, vr, vi                     # +m
            if m % 2 == 0:                             # -m : (-1)^m * conj(+m)
                yield base - m, vr, -vi
            else:
                yield base - m, -vr, vi


# ------------------------------ Pallas kernel --------------------------------
def make_sh_kernel(lmax, alm, blm):
    def kernel(rhat_ref, y_ref):
        # rhat_ref block: (3, TM, 128); y_ref block: (2, nsh, TM, 128).
        rx = rhat_ref[0]           # (TM, 128) full vreg tiles
        ry = rhat_ref[1]
        rz = rhat_ref[2]

        def as_arr(v):
            if isinstance(v, (int, float)):
                return jnp.full_like(rx, v)
            return v

        # Direct per-channel stores; no concatenate / relayout.
        for row, vr, vi in _ylm_channels(rx, ry, rz, lmax, alm, blm):
            y_ref[0, row] = as_arr(vr)
            y_ref[1, row] = as_arr(vi)

    return kernel


# ------------------------------ wrappers -------------------------------------
def spherical_harmonics_channels_first(
    rhat, lmax, *, vmem_budget_bytes=16 * 1024 * 1024, tile_rows=None
):
    """Pallas spherical harmonics; returns (yr, yi), each [(lmax+1)^2, N] float32.

    Channels-first layout avoids any extra HBM pass over the (dominant) output.
    """
    rhat = jnp.asarray(rhat, dtype=jnp.float32)
    N = rhat.shape[0]
    nsh = (lmax + 1) ** 2
    alm, blm = precompute_ab(lmax)

    n_rows = pl.cdiv(N, LANE)

    # Rows (of 128 points) per grid step, sized against a VMEM budget:
    # double-buffered input+output blocks plus in-kernel live temporaries.
    live_arrays = 2 * (3 + 2 * nsh) + (lmax * (lmax + 1) // 2 + 8)
    bytes_per_row = live_arrays * LANE * 4
    if tile_rows is not None:
        tm = tile_rows
    else:
        tm = max(8, (vmem_budget_bytes // bytes_per_row) // 8 * 8)
        tm = min(tm, 1024)
    if n_rows <= tm:
        tm = n_rows                    # single step; block == full dim
        n_rows_pad = n_rows
    else:
        n_rows_pad = pl.cdiv(n_rows, tm) * tm
    n_pad = n_rows_pad * LANE

    # Single pad pass, then reshape points into (rows, 128) lane tiles.
    rhat_t = jnp.pad(rhat.T, ((0, 0), (0, n_pad - N))).reshape(3, n_rows_pad, LANE)

    kernel = make_sh_kernel(lmax, alm, blm)
    cost = pl.CostEstimate(
        flops=(8 * nsh + 12 * max(lmax, 1)) * n_pad,
        transcendentals=0,
        bytes_accessed=(3 + 2 * nsh) * n_pad * 4,
    )

    y = pl.pallas_call(
        kernel,
        out_shape=jax.ShapeDtypeStruct((2, nsh, n_rows_pad, LANE), jnp.float32),
        grid=(n_rows_pad // tm,),
        in_specs=[pl.BlockSpec((3, tm, LANE), lambda i: (0, i, 0))],
        out_specs=pl.BlockSpec((2, nsh, tm, LANE), lambda i: (0, 0, i, 0)),
        compiler_params=pltpu.CompilerParams(
            dimension_semantics=("parallel",),
            vmem_limit_bytes=max(32 * 1024 * 1024, tm * bytes_per_row + (8 << 20)),
        ),
        cost_estimate=cost,
    )(rhat_t)

    y = y.reshape(2, nsh, n_pad)[:, :, :N]
    return y[0], y[1]


def spherical_harmonics(rhat, lmax, **kwargs):
    """Module-compatible output: [N, (lmax+1)^2] complex64 (like forward())."""
    yr, yi = spherical_harmonics_channels_first(rhat, lmax, **kwargs)
    # Single transpose+complex pass (fused by XLA); prefer the channels-first
    # function above if the consumer can take real/imag [(lmax+1)^2, N].
    return jax.lax.complex(yr.T, yi.T)


# ----------------------------- references ------------------------------------
def spherical_harmonics_ref(rhat, lmax):
    """Pure-JAX reference using the same recurrence (validates plumbing)."""
    rhat = jnp.asarray(rhat, dtype=jnp.float32)
    rx, ry, rz = rhat[:, 0], rhat[:, 1], rhat[:, 2]
    alm, blm = precompute_ab(lmax)
    nsh = (lmax + 1) ** 2
    rows_r = [None] * nsh
    rows_i = [None] * nsh
    for row, vr, vi in _ylm_channels(rx, ry, rz, lmax, alm, blm):
        rows_r[row] = jnp.broadcast_to(jnp.asarray(vr, jnp.float32), rx.shape)
        rows_i[row] = jnp.broadcast_to(jnp.asarray(vi, jnp.float32), rx.shape)
    yr = jnp.stack(rows_r, axis=1)
    yi = jnp.stack(rows_i, axis=1)
    return jax.lax.complex(yr, yi)


def spherical_harmonics_closed_form_lmax3(rhat):
    """Independent reference: textbook Cartesian Y_l^m (Condon-Shortley), lmax=3."""
    rhat = jnp.asarray(rhat, dtype=jnp.float32)
    x, y, z = rhat[:, 0], rhat[:, 1], rhat[:, 2]
    xp = jax.lax.complex(x, y)                 # x + iy
    xm = jax.lax.complex(x, -y)                # x - iy
    zc = z.astype(jnp.complex64)
    z2 = (z * z).astype(jnp.complex64)
    z3 = (z * z * z).astype(jnp.complex64)
    s, pi = math.sqrt, math.pi
    rows = [
        jnp.full_like(xp, 0.5 * s(1.0 / pi)),                      # (0, 0)
        0.5 * s(3.0 / (2.0 * pi)) * xm,                            # (1,-1)
        0.5 * s(3.0 / pi) * zc,                                    # (1, 0)
        -0.5 * s(3.0 / (2.0 * pi)) * xp,                           # (1, 1)
        0.25 * s(15.0 / (2.0 * pi)) * xm * xm,                     # (2,-2)
        0.5 * s(15.0 / (2.0 * pi)) * xm * zc,                      # (2,-1)
        0.25 * s(5.0 / pi) * (3.0 * z2 - 1.0),                     # (2, 0)
        -0.5 * s(15.0 / (2.0 * pi)) * xp * zc,                     # (2, 1)
        0.25 * s(15.0 / (2.0 * pi)) * xp * xp,                     # (2, 2)
        0.125 * s(35.0 / pi) * xm * xm * xm,                       # (3,-3)
        0.25 * s(105.0 / (2.0 * pi)) * xm * xm * zc,               # (3,-2)
        0.125 * s(21.0 / pi) * xm * (5.0 * z2 - 1.0),              # (3,-1)
        0.25 * s(7.0 / pi) * (5.0 * z3 - 3.0 * zc),                # (3, 0)
        -0.125 * s(21.0 / pi) * xp * (5.0 * z2 - 1.0),             # (3, 1)
        0.25 * s(105.0 / (2.0 * pi)) * xp * xp * zc,               # (3, 2)
        -0.125 * s(35.0 / pi) * xp * xp * xp,                      # (3, 3)
    ]
    return jnp.stack(rows, axis=1)


if __name__ == "__main__":
    key = jax.random.PRNGKey(0)

    # --- test 1: small N, lmax=3, checked against an independent closed form ---
    lmax = 3
    N = 200  # intentionally not a multiple of the 128-lane tile
    k1, k2 = jax.random.split(key)
    v = jax.random.normal(k1, (N, 3), dtype=jnp.float32)
    rhat = v / jnp.linalg.norm(v, axis=-1, keepdims=True)

    out = spherical_harmonics(rhat, lmax)
    out = jax.block_until_ready(out)
    assert out.shape == (N, (lmax + 1) ** 2)
    assert out.dtype == jnp.complex64

    ref = spherical_harmonics_ref(rhat, lmax)
    assert jnp.allclose(out.real, ref.real, atol=1e-6, rtol=1e-5)
    assert jnp.allclose(out.imag, ref.imag, atol=1e-6, rtol=1e-5)

    closed = spherical_harmonics_closed_form_lmax3(rhat)
    assert jnp.allclose(out.real, closed.real, atol=2e-5, rtol=2e-4)
    assert jnp.allclose(out.imag, closed.imag, atol=2e-5, rtol=2e-4)

    # --- test 2: multi-step grid (forced small tile), lmax=2, padding of rows ---
    lmax2 = 2
    N2 = 2560
    v2 = jax.random.normal(k2, (N2, 3), dtype=jnp.float32)
    rhat2 = v2 / jnp.linalg.norm(v2, axis=-1, keepdims=True)
    out2 = jax.block_until_ready(spherical_harmonics(rhat2, lmax2, tile_rows=8))
    ref2 = spherical_harmonics_ref(rhat2, lmax2)
    assert out2.shape == (N2, (lmax2 + 1) ** 2)
    assert jnp.allclose(out2.real, ref2.real, atol=1e-6, rtol=1e-5)
    assert jnp.allclose(out2.imag, ref2.imag, atol=1e-6, rtol=1e-5)

    print("KERNEL_OK")
</pallas_src>

<mosaic_0001>
module attributes {stable_mosaic.version = 11 : i64} {
  func.func @kernel(%arg0: i32, %arg1: memref<3x2x128xf32, #tpu.memory_space<vmem>>, %arg2: memref<2x16x2x128xf32, #tpu.memory_space<vmem>>) attributes {dimension_semantics = [#tpu.dimension_semantics<parallel>], iteration_bounds = array<i64: 1>, scalar_prefetch = 0 : i64, scratch_operands = 0 : i64, tpu.core_type = #tpu.core_type<tc>, window_params = [{transform_indices = @transform_0, window_bounds = array<i64: 3, 2, 128>}, {transform_indices = @transform_1, window_bounds = array<i64: 2, 16, 2, 128>}]} {
    %c0 = arith.constant 0 : index
    %c0_0 = arith.constant 0 : index
    %c0_1 = arith.constant 0 : index
    %0 = vector.load %arg1[%c0, %c0_0, %c0_1] : memref<3x2x128xf32, #tpu.memory_space<vmem>>, vector<1x2x128xf32>
    %1 = vector.shape_cast %0 : vector<1x2x128xf32> to vector<2x128xf32>
    %c1 = arith.constant 1 : index
    %c0_2 = arith.constant 0 : index
    %c0_3 = arith.constant 0 : index
    %2 = vector.load %arg1[%c1, %c0_2, %c0_3] : memref<3x2x128xf32, #tpu.memory_space<vmem>>, vector<1x2x128xf32>
    %3 = vector.shape_cast %2 : vector<1x2x128xf32> to vector<2x128xf32>
    %c2 = arith.constant 2 : index
    %c0_4 = arith.constant 0 : index
    %c0_5 = arith.constant 0 : index
    %4 = vector.load %arg1[%c2, %c0_4, %c0_5] : memref<3x2x128xf32, #tpu.memory_space<vmem>>, vector<1x2x128xf32>
    %5 = vector.shape_cast %4 : vector<1x2x128xf32> to vector<2x128xf32>
    %cst = arith.constant 0.488602519 : f32
    %6 = vector.broadcast %cst : f32 to vector<2x128xf32>
    %7 = arith.mulf %6, %5 : vector<2x128xf32>
    %8 = arith.mulf %5, %7 : vector<2x128xf32>
    %cst_6 = arith.constant -0.162867501 : f32
    %9 = vector.broadcast %cst_6 : f32 to vector<2x128xf32>
    %10 = arith.addf %8, %9 : vector<2x128xf32>
    %cst_7 = arith.constant 1.93649173 : f32
    %11 = vector.broadcast %cst_7 : f32 to vector<2x128xf32>
    %12 = arith.mulf %11, %10 : vector<2x128xf32>
    %cst_8 = arith.constant -0.772548377 : f32
    %13 = vector.broadcast %cst_8 : f32 to vector<2x128xf32>
    %14 = arith.mulf %13, %5 : vector<2x128xf32>
    %15 = arith.mulf %5, %12 : vector<2x128xf32>
    %cst_9 = arith.constant -0.516397774 : f32
    %16 = vector.broadcast %cst_9 : f32 to vector<2x128xf32>
    %17 = arith.mulf %16, %7 : vector<2x128xf32>
    %18 = arith.addf %15, %17 : vector<2x128xf32>
    %cst_10 = arith.constant 1.97202659 : f32
    %19 = vector.broadcast %cst_10 : f32 to vector<2x128xf32>
    %20 = arith.mulf %19, %18 : vector<2x128xf32>
    %21 = arith.mulf %5, %14 : vector<2x128xf32>
    %cst_11 = arith.constant 0.154509678 : f32
    %22 = vector.broadcast %cst_11 : f32 to vector<2x128xf32>
    %23 = arith.addf %21, %22 : vector<2x128xf32>
    %cst_12 = arith.constant 2.091650e+00 : f32
    %24 = vector.broadcast %cst_12 : f32 to vector<2x128xf32>
    %25 = arith.mulf %24, %23 : vector<2x128xf32>
    %cst_13 = arith.constant 1.02198553 : f32
    %26 = vector.broadcast %cst_13 : f32 to vector<2x128xf32>
    %27 = arith.mulf %26, %5 : vector<2x128xf32>
    %cst_14 = arith.constant 0.282094806 : f32
    %28 = vector.broadcast %cst_14 : f32 to vector<2x128xf32>
    %c0_15 = arith.constant 0 : index
    %c0_16 = arith.constant 0 : index
    %c0_17 = arith.constant 0 : index
    %c0_18 = arith.constant 0 : index
    %29 = vector.load %arg2[%c0_15, %c0_16, %c0_17, %c0_18] : memref<2x16x2x128xf32, #tpu.memory_space<vmem>>, vector<1x1x2x128xf32>
    %30 = vector.shape_cast %29 : vector<1x1x2x128xf32> to vector<2x128xf32>
    %31 = vector.shape_cast %28 : vector<2x128xf32> to vector<1x1x2x128xf32>
    tpu.vector_store %arg2[%c0_15, %c0_16, %c0_17, %c0_18], %31 {strides = array<i32>} : memref<2x16x2x128xf32, #tpu.memory_space<vmem>>, vector<1x1x2x128xf32>,
    %cst_19 = arith.constant 0.000000e+00 : f32
    %32 = vector.broadcast %cst_19 : f32 to vector<2x128xf32>
    %c1_20 = arith.constant 1 : index
    %c0_21 = arith.constant 0 : index
    %c0_22 = arith.constant 0 : index
    %c0_23 = arith.constant 0 : index
    %33 = vector.load %arg2[%c1_20, %c0_21, %c0_22, %c0_23] : memref<2x16x2x128xf32, #tpu.memory_space<vmem>>, vector<1x1x2x128xf32>
    %34 = vector.shape_cast %33 : vector<1x1x2x128xf32> to vector<2x128xf32>
    %35 = vector.shape_cast %32 : vector<2x128xf32> to vector<1x1x2x128xf32>
    tpu.vector_store %arg2[%c1_20, %c0_21, %c0_22, %c0_23], %35 {strides = array<i32>} : memref<2x16x2x128xf32, #tpu.memory_space<vmem>>, vector<1x1x2x128xf32>,
    %c0_24 = arith.constant 0 : index
    %c2_25 = arith.constant 2 : index
    %c0_26 = arith.constant 0 : index
    %c0_27 = arith.constant 0 : index
    %36 = vector.load %arg2[%c0_24, %c2_25, %c0_26, %c0_27] : memref<2x16x2x128xf32, #tpu.memory_space<vmem>>, vector<1x1x2x128xf32>
    %37 = vector.shape_cast %36 : vector<1x1x2x128xf32> to vector<2x128xf32>
    %38 = vector.shape_cast %7 : vector<2x128xf32> to vector<1x1x2x128xf32>
    tpu.vector_store %arg2[%c0_24, %c2_25, %c0_26, %c0_27], %38 {strides = array<i32>} : memref<2x16x2x128xf32, #tpu.memory_space<vmem>>, vector<1x1x2x128xf32>,
    %cst_28 = arith.constant 0.000000e+00 : f32
    %39 = vector.broadcast %cst_28 : f32 to vector<2x128xf32>
    %c1_29 = arith.constant 1 : index
    %c2_30 = arith.constant 2 : index
    %c0_31 = arith.constant 0 : index
    %c0_32 = arith.constant 0 : index
    %40 = vector.load %arg2[%c1_29, %c2_30, %c0_31, %c0_32] : memref<2x16x2x128xf32, #tpu.memory_space<vmem>>, vector<1x1x2x128xf32>
    %41 = vector.shape_cast %40 : vector<1x1x2x128xf32> to vector<2x128xf32>
    %42 = vector.shape_cast %39 : vector<2x128xf32> to vector<1x1x2x128xf32>
    tpu.vector_store %arg2[%c1_29, %c2_30, %c0_31, %c0_32], %42 {strides = array<i32>} : memref<2x16x2x128xf32, #tpu.memory_space<vmem>>, vector<1x1x2x128xf32>,
    %c0_33 = arith.constant 0 : index
    %c6 = arith.constant 6 : index
    %c0_34 = arith.constant 0 : index
    %c0_35 = arith.constant 0 : index
    %43 = vector.load %arg2[%c0_33, %c6, %c0_34, %c0_35] : memref<2x16x2x128xf32, #tpu.memory_space<vmem>>, vector<1x1x2x128xf32>
    %44 = vector.shape_cast %43 : vector<1x1x2x128xf32> to vector<2x128xf32>
    %45 = vector.shape_cast %12 : vector<2x128xf32> to vector<1x1x2x128xf32>
    tpu.vector_store %arg2[%c0_33, %c6, %c0_34, %c0_35], %45 {strides = array<i32>} : memref<2x16x2x128xf32, #tpu.memory_space<vmem>>, vector<1x1x2x128xf32>,
    %cst_36 = arith.constant 0.000000e+00 : f32
    %46 = vector.broadcast %cst_36 : f32 to vector<2x128xf32>
    %c1_37 = arith.constant 1 : index
    %c6_38 = arith.constant 6 : index
    %c0_39 = arith.constant 0 : index
    %c0_40 = arith.constant 0 : index
    %47 = vector.load %arg2[%c1_37, %c6_38, %c0_39, %c0_40] : memref<2x16x2x128xf32, #tpu.memory_space<vmem>>, vector<1x1x2x128xf32>
    %48 = vector.shape_cast %47 : vector<1x1x2x128xf32> to vector<2x128xf32>
    %49 = vector.shape_cast %46 : vector<2x128xf32> to vector<1x1x2x128xf32>
    tpu.vector_store %arg2[%c1_37, %c6_38, %c0_39, %c0_40], %49 {strides = array<i32>} : memref<2x16x2x128xf32, #tpu.memory_space<vmem>>, vector<1x1x2x128xf32>,
    %c0_41 = arith.constant 0 : index
    %c12 = arith.constant 12 : index
    %c0_42 = arith.constant 0 : index
    %c0_43 = arith.constant 0 : index
    %50 = vector.load %arg2[%c0_41, %c12, %c0_42, %c0_43] : memref<2x16x2x128xf32, #tpu.memory_space<vmem>>, vector<1x1x2x128xf32>
    %51 = vector.shape_cast %50 : vector<1x1x2x128xf32> to vector<2x128xf32>
    %52 = vector.shape_cast %20 : vector<2x128xf32> to vector<1x1x2x128xf32>
    tpu.vector_store %arg2[%c0_41, %c12, %c0_42, %c0_43], %52 {strides = array<i32>} : memref<2x16x2x128xf32, #tpu.memory_space<vmem>>, vector<1x1x2x128xf32>,
    %cst_44 = arith.constant 0.000000e+00 : f32
    %53 = vector.broadcast %cst_44 : f32 to vector<2x128xf32>
    %c1_45 = arith.constant 1 : index
    %c12_46 = arith.constant 12 : index
    %c0_47 = arith.constant 0 : index
    %c0_48 = arith.constant 0 : index
    %54 = vector.load %arg2[%c1_45, %c12_46, %c0_47, %c0_48] : memref<2x16x2x128xf32, #tpu.memory_space<vmem>>, vector<1x1x2x128xf32>
    %55 = vector.shape_cast %54 : vector<1x1x2x128xf32> to vector<2x128xf32>
    %56 = vector.shape_cast %53 : vector<2x128xf32> to vector<1x1x2x128xf32>
    tpu.vector_store %arg2[%c1_45, %c12_46, %c0_47, %c0_48], %56 {strides = array<i32>} : memref<2x16x2x128xf32, #tpu.memory_space<vmem>>, vector<1x1x2x128xf32>,
    %cst_49 = arith.constant -0.345494151 : f32
    %57 = vector.broadcast %cst_49 : f32 to vector<2x128xf32>
    %58 = arith.mulf %1, %57 : vector<2x128xf32>
    %cst_50 = arith.constant -0.345494151 : f32
    %59 = vector.broadcast %cst_50 : f32 to vector<2x128xf32>
    %60 = arith.mulf %3, %59 : vector<2x128xf32>
    %c0_51 = arith.constant 0 : index
    %c3 = arith.constant 3 : index
    %c0_52 = arith.constant 0 : index
    %c0_53 = arith.constant 0 : index
    %61 = vector.load %arg2[%c0_51, %c3, %c0_52, %c0_53] : memref<2x16x2x128xf32, #tpu.memory_space<vmem>>, vector<1x1x2x128xf32>
    %62 = vector.shape_cast %61 : vector<1x1x2x128xf32> to vector<2x128xf32>
    %63 = vector.shape_cast %58 : vector<2x128xf32> to vector<1x1x2x128xf32>
    tpu.vector_store %arg2[%c0_51, %c3, %c0_52, %c0_53], %63 {strides = array<i32>} : memref<2x16x2x128xf32, #tpu.memory_space<vmem>>, vector<1x1x2x128xf32>,
    %c1_54 = arith.constant 1 : index
    %c3_55 = arith.constant 3 : index
    %c0_56 = arith.constant 0 : index
    %c0_57 = arith.constant 0 : index
    %64 = vector.load %arg2[%c1_54, %c3_55, %c0_56, %c0_57] : memref<2x16x2x128xf32, #tpu.memory_space<vmem>>, vector<1x1x2x128xf32>
    %65 = vector.shape_cast %64 : vector<1x1x2x128xf32> to vector<2x128xf32>
    %66 = vector.shape_cast %60 : vector<2x128xf32> to vector<1x1x2x128xf32>
    tpu.vector_store %arg2[%c1_54, %c3_55, %c0_56, %c0_57], %66 {strides = array<i32>} : memref<2x16x2x128xf32, #tpu.memory_space<vmem>>, vector<1x1x2x128xf32>,
    %cst_58 = arith.constant 0.000000e+00 : f32
    %67 = vector.broadcast %cst_58 : f32 to vector<2x128xf32>
    %68 = arith.subf %67, %58 : vector<2x128xf32>
    %c0_59 = arith.constant 0 : index
    %c1_60 = arith.constant 1 : index
    %c0_61 = arith.constant 0 : index
    %c0_62 = arith.constant 0 : index
    %69 = vector.load %arg2[%c0_59, %c1_60, %c0_61, %c0_62] : memref<2x16x2x128xf32, #tpu.memory_space<vmem>>, vector<1x1x2x128xf32>
    %70 = vector.shape_cast %69 : vector<1x1x2x128xf32> to vector<2x128xf32>
    %71 = vector.shape_cast %68 : vector<2x128xf32> to vector<1x1x2x128xf32>
    tpu.vector_store %arg2[%c0_59, %c1_60, %c0_61, %c0_62], %71 {strides = array<i32>} : memref<2x16x2x128xf32, #tpu.memory_space<vmem>>, vector<1x1x2x128xf32>,
    %c1_63 = arith.constant 1 : index
    %c1_64 = arith.constant 1 : index
    %c0_65 = arith.constant 0 : index
    %c0_66 = arith.constant 0 : index
    %72 = vector.load %arg2[%c1_63, %c1_64, %c0_65, %c0_66] : memref<2x16x2x128xf32, #tpu.memory_space<vmem>>, vector<1x1x2x128xf32>
    %73 = vector.shape_cast %72 : vector<1x1x2x128xf32> to vector<2x128xf32>
    %74 = vector.shape_cast %60 : vector<2x128xf32> to vector<1x1x2x128xf32>
    tpu.vector_store %arg2[%c1_63, %c1_64, %c0_65, %c0_66], %74 {strides = array<i32>} : memref<2x16x2x128xf32, #tpu.memory_space<vmem>>, vector<1x1x2x128xf32>,
    %75 = arith.mulf %1, %14 : vector<2x128xf32>
    %76 = arith.mulf %3, %14 : vector<2x128xf32>
    %c0_67 = arith.constant 0 : index
    %c7 = arith.constant 7 : index
    %c0_68 = arith.constant 0 : index
    %c0_69 = arith.constant 0 : index
    %77 = vector.load %arg2[%c0_67, %c7, %c0_68, %c0_69] : memref<2x16x2x128xf32, #tpu.memory_space<vmem>>, vector<1x1x2x128xf32>
    %78 = vector.shape_cast %77 : vector<1x1x2x128xf32> to vector<2x128xf32>
    %79 = vector.shape_cast %75 : vector<2x128xf32> to vector<1x1x2x128xf32>
    tpu.vector_store %arg2[%c0_67, %c7, %c0_68, %c0_69], %79 {strides = array<i32>} : memref<2x16x2x128xf32, #tpu.memory_space<vmem>>, vector<1x1x2x128xf32>,
    %c1_70 = arith.constant 1 : index
    %c7_71 = arith.constant 7 : index
    %c0_72 = arith.constant 0 : index
    %c0_73 = arith.constant 0 : index
    %80 = vector.load %arg2[%c1_70, %c7_71, %c0_72, %c0_73] : memref<2x16x2x128xf32, #tpu.memory_space<vmem>>, vector<1x1x2x128xf32>
    %81 = vector.shape_cast %80 : vector<1x1x2x128xf32> to vector<2x128xf32>
    %82 = vector.shape_cast %76 : vector<2x128xf32> to vector<1x1x2x128xf32>
    tpu.vector_store %arg2[%c1_70, %c7_71, %c0_72, %c0_73], %82 {strides = array<i32>} : memref<2x16x2x128xf32, #tpu.memory_space<vmem>>, vector<1x1x2x128xf32>,
    %cst_74 = arith.constant 0.000000e+00 : f32
    %83 = vector.broadcast %cst_74 : f32 to vector<2x128xf32>
    %84 = arith.subf %83, %75 : vector<2x128xf32>
    %c0_75 = arith.constant 0 : index
    %c5 = arith.constant 5 : index
    %c0_76 = arith.constant 0 : index
    %c0_77 = arith.constant 0 : index
    %85 = vector.load %arg2[%c0_75, %c5, %c0_76, %c0_77] : memref<2x16x2x128xf32, #tpu.memory_space<vmem>>, vector<1x1x2x128xf32>
    %86 = vector.shape_cast %85 : vector<1x1x2x128xf32> to vector<2x128xf32>
    %87 = vector.shape_cast %84 : vector<2x128xf32> to vector<1x1x2x128xf32>
    tpu.vector_store %arg2[%c0_75, %c5, %c0_76, %c0_77], %87 {strides = array<i32>} : memref<2x16x2x128xf32, #tpu.memory_space<vmem>>, vector<1x1x2x128xf32>,
    %c1_78 = arith.constant 1 : index
    %c5_79 = arith.constant 5 : index
    %c0_80 = arith.constant 0 : index
    %c0_81 = arith.constant 0 : index
    %88 = vector.load %arg2[%c1_78, %c5_79, %c0_80, %c0_81] : memref<2x16x2x128xf32, #tpu.memory_space<vmem>>, vector<1x1x2x128xf32>
    %89 = vector.shape_cast %88 : vector<1x1x2x128xf32> to vector<2x128xf32>
    %90 = vector.shape_cast %76 : vector<2x128xf32> to vector<1x1x2x128xf32>
    tpu.vector_store %arg2[%c1_78, %c5_79, %c0_80, %c0_81], %90 {strides = array<i32>} : memref<2x16x2x128xf32, #tpu.memory_space<vmem>>, vector<1x1x2x128xf32>,
    %91 = arith.mulf %1, %25 : vector<2x128xf32>
    %92 = arith.mulf %3, %25 : vector<2x128xf32>
    %c0_82 = arith.constant 0 : index
    %c13 = arith.constant 13 : index
    %c0_83 = arith.constant 0 : index
    %c0_84 = arith.constant 0 : index
    %93 = vector.load %arg2[%c0_82, %c13, %c0_83, %c0_84] : memref<2x16x2x128xf32, #tpu.memory_space<vmem>>, vector<1x1x2x128xf32>
    %94 = vector.shape_cast %93 : vector<1x1x2x128xf32> to vector<2x128xf32>
    %95 = vector.shape_cast %91 : vector<2x128xf32> to vector<1x1x2x128xf32>
    tpu.vector_store %arg2[%c0_82, %c13, %c0_83, %c0_84], %95 {strides = array<i32>} : memref<2x16x2x128xf32, #tpu.memory_space<vmem>>, vector<1x1x2x128xf32>,
    %c1_85 = arith.constant 1 : index
    %c13_86 = arith.constant 13 : index
    %c0_87 = arith.constant 0 : index
    %c0_88 = arith.constant 0 : index
    %96 = vector.load %arg2[%c1_85, %c13_86, %c0_87, %c0_88] : memref<2x16x2x128xf32, #tpu.memory_space<vmem>>, vector<1x1x2x128xf32>
    %97 = vector.shape_cast %96 : vector<1x1x2x128xf32> to vector<2x128xf32>
    %98 = vector.shape_cast %92 : vector<2x128xf32> to vector<1x1x2x128xf32>
    tpu.vector_store %arg2[%c1_85, %c13_86, %c0_87, %c0_88], %98 {strides = array<i32>} : memref<2x16x2x128xf32, #tpu.memory_space<vmem>>, vector<1x1x2x128xf32>,
    %cst_89 = arith.constant 0.000000e+00 : f32
    %99 = vector.broadcast %cst_89 : f32 to vector<2x128xf32>
    %100 = arith.subf %99, %91 : vector<2x128xf32>
    %c0_90 = arith.constant 0 : index
    %c11 = arith.constant 11 : index
    %c0_91 = arith.constant 0 : index
    %c0_92 = arith.constant 0 : index
    %101 = vector.load %arg2[%c0_90, %c11, %c0_91, %c0_92] : memref<2x16x2x128xf32, #tpu.memory_space<vmem>>, vector<1x1x2x128xf32>
    %102 = vector.shape_cast %101 : vector<1x1x2x128xf32> to vector<2x128xf32>
    %103 = vector.shape_cast %100 : vector<2x128xf32> to vector<1x1x2x128xf32>
    tpu.vector_store %arg2[%c0_90, %c11, %c0_91, %c0_92], %103 {strides = array<i32>} : memref<2x16x2x128xf32, #tpu.memory_space<vmem>>, vector<1x1x2x128xf32>,
    %c1_93 = arith.constant 1 : index
    %c11_94 = arith.constant 11 : index
    %c0_95 = arith.constant 0 : index
    %c0_96 = arith.constant 0 : index
    %104 = vector.load %arg2[%c1_93, %c11_94, %c0_95, %c0_96] : memref<2x16x2x128xf32, #tpu.memory_space<vmem>>, vector<1x1x2x128xf32>
    %105 = vector.shape_cast %104 : vector<1x1x2x128xf32> to vector<2x128xf32>
    %106 = vector.shape_cast %92 : vector<2x128xf32> to vector<1x1x2x128xf32>
    tpu.vector_store %arg2[%c1_93, %c11_94, %c0_95, %c0_96], %106 {strides = array<i32>} : memref<2x16x2x128xf32, #tpu.memory_space<vmem>>, vector<1x1x2x128xf32>,
    %107 = arith.mulf %1, %1 : vector<2x128xf32>
    %108 = arith.mulf %3, %3 : vector<2x128xf32>
    %109 = arith.subf %107, %108 : vector<2x128xf32>
    %110 = arith.mulf %1, %3 : vector<2x128xf32>
    %111 = arith.mulf %3, %1 : vector<2x128xf32>
    %112 = arith.addf %110, %111 : vector<2x128xf32>
    %cst_97 = arith.constant 0.386274189 : f32
    %113 = vector.broadcast %cst_97 : f32 to vector<2x128xf32>
    %114 = arith.mulf %109, %113 : vector<2x128xf32>
    %cst_98 = arith.constant 0.386274189 : f32
    %115 = vector.broadcast %cst_98 : f32 to vector<2x128xf32>
    %116 = arith.mulf %112, %115 : vector<2x128xf32>
    %c0_99 = arith.constant 0 : index
    %c8 = arith.constant 8 : index
    %c0_100 = arith.constant 0 : index
    %c0_101 = arith.constant 0 : index
    %117 = vector.load %arg2[%c0_99, %c8, %c0_100, %c0_101] : memref<2x16x2x128xf32, #tpu.memory_space<vmem>>, vector<1x1x2x128xf32>
    %118 = vector.shape_cast %117 : vector<1x1x2x128xf32> to vector<2x128xf32>
    %119 = vector.shape_cast %114 : vector<2x128xf32> to vector<1x1x2x128xf32>
    tpu.vector_store %arg2[%c0_99, %c8, %c0_100, %c0_101], %119 {strides = array<i32>} : memref<2x16x2x128xf32, #tpu.memory_space<vmem>>, vector<1x1x2x128xf32>,
    %c1_102 = arith.constant 1 : index
    %c8_103 = arith.constant 8 : index
    %c0_104 = arith.constant 0 : index
    %c0_105 = arith.constant 0 : index
    %120 = vector.load %arg2[%c1_102, %c8_103, %c0_104, %c0_105] : memref<2x16x2x128xf32, #tpu.memory_space<vmem>>, vector<1x1x2x128xf32>
    %121 = vector.shape_cast %120 : vector<1x1x2x128xf32> to vector<2x128xf32>
    %122 = vector.shape_cast %116 : vector<2x128xf32> to vector<1x1x2x128xf32>
    tpu.vector_store %arg2[%c1_102, %c8_103, %c0_104, %c0_105], %122 {strides = array<i32>} : memref<2x16x2x128xf32, #tpu.memory_space<vmem>>, vector<1x1x2x128xf32>,
    %cst_106 = arith.constant 0.000000e+00 : f32
    %123 = vector.broadcast %cst_106 : f32 to vector<2x128xf32>
    %124 = arith.subf %123, %116 : vector<2x128xf32>
    %c0_107 = arith.constant 0 : index
    %c4 = arith.constant 4 : index
    %c0_108 = arith.constant 0 : index
    %c0_109 = arith.constant 0 : index
    %125 = vector.load %arg2[%c0_107, %c4, %c0_108, %c0_109] : memref<2x16x2x128xf32, #tpu.memory_space<vmem>>, vector<1x1x2x128xf32>
    %126 = vector.shape_cast %125 : vector<1x1x2x128xf32> to vector<2x128xf32>
    %127 = vector.shape_cast %114 : vector<2x128xf32> to vector<1x1x2x128xf32>
    tpu.vector_store %arg2[%c0_107, %c4, %c0_108, %c0_109], %127 {strides = array<i32>} : memref<2x16x2x128xf32, #tpu.memory_space<vmem>>, vector<1x1x2x128xf32>,
    %c1_110 = arith.constant 1 : index
    %c4_111 = arith.constant 4 : index
    %c0_112 = arith.constant 0 : index
    %c0_113 = arith.constant 0 : index
    %128 = vector.load %arg2[%c1_110, %c4_111, %c0_112, %c0_113] : memref<2x16x2x128xf32, #tpu.memory_space<vmem>>, vector<1x1x2x128xf32>
    %129 = vector.shape_cast %128 : vector<1x1x2x128xf32> to vector<2x128xf32>
    %130 = vector.shape_cast %124 : vector<2x128xf32> to vector<1x1x2x128xf32>
    tpu.vector_store %arg2[%c1_110, %c4_111, %c0_112, %c0_113], %130 {strides = array<i32>} : memref<2x16x2x128xf32, #tpu.memory_space<vmem>>, vector<1x1x2x128xf32>,
    %131 = arith.mulf %109, %27 : vector<2x128xf32>
    %132 = arith.mulf %112, %27 : vector<2x128xf32>
    %c0_114 = arith.constant 0 : index
    %c14 = arith.constant 14 : index
    %c0_115 = arith.constant 0 : index
    %c0_116 = arith.constant 0 : index
    %133 = vector.load %arg2[%c0_114, %c14, %c0_115, %c0_116] : memref<2x16x2x128xf32, #tpu.memory_space<vmem>>, vector<1x1x2x128xf32>
    %134 = vector.shape_cast %133 : vector<1x1x2x128xf32> to vector<2x128xf32>
    %135 = vector.shape_cast %131 : vector<2x128xf32> to vector<1x1x2x128xf32>
    tpu.vector_store %arg2[%c0_114, %c14, %c0_115, %c0_116], %135 {strides = array<i32>} : memref<2x16x2x128xf32, #tpu.memory_space<vmem>>, vector<1x1x2x128xf32>,
    %c1_117 = arith.constant 1 : index
    %c14_118 = arith.constant 14 : index
    %c0_119 = arith.constant 0 : index
    %c0_120 = arith.constant 0 : index
    %136 = vector.load %arg2[%c1_117, %c14_118, %c0_119, %c0_120] : memref<2x16x2x128xf32, #tpu.memory_space<vmem>>, vector<1x1x2x128xf32>
    %137 = vector.shape_cast %136 : vector<1x1x2x128xf32> to vector<2x128xf32>
    %138 = vector.shape_cast %132 : vector<2x128xf32> to vector<1x1x2x128xf32>
    tpu.vector_store %arg2[%c1_117, %c14_118, %c0_119, %c0_120], %138 {strides = array<i32>} : memref<2x16x2x128xf32, #tpu.memory_space<vmem>>, vector<1x1x2x128xf32>,
    %cst_121 = arith.constant 0.000000e+00 : f32
    %139 = vector.broadcast %cst_121 : f32 to vector<2x128xf32>
    %140 = arith.subf %139, %132 : vector<2x128xf32>
    %c0_122 = arith.constant 0 : index
    %c10 = arith.constant 10 : index
    %c0_123 = arith.constant 0 : index
    %c0_124 = arith.constant 0 : index
    %141 = vector.load %arg2[%c0_122, %c10, %c0_123, %c0_124] : memref<2x16x2x128xf32, #tpu.memory_space<vmem>>, vector<1x1x2x128xf32>
    %142 = vector.shape_cast %141 : vector<1x1x2x128xf32> to vector<2x128xf32>
    %143 = vector.shape_cast %131 : vector<2x128xf32> to vector<1x1x2x128xf32>
    tpu.vector_store %arg2[%c0_122, %c10, %c0_123, %c0_124], %143 {strides = array<i32>} : memref<2x16x2x128xf32, #tpu.memory_space<vmem>>, vector<1x1x2x128xf32>,
    %c1_125 = arith.constant 1 : index
    %c10_126 = arith.constant 10 : index
    %c0_127 = arith.constant 0 : index
    %c0_128 = arith.constant 0 : index
    %144 = vector.load %arg2[%c1_125, %c10_126, %c0_127, %c0_128] : memref<2x16x2x128xf32, #tpu.memory_space<vmem>>, vector<1x1x2x128xf32>
    %145 = vector.shape_cast %144 : vector<1x1x2x128xf32> to vector<2x128xf32>
    %146 = vector.shape_cast %140 : vector<2x128xf32> to vector<1x1x2x128xf32>
    tpu.vector_store %arg2[%c1_125, %c10_126, %c0_127, %c0_128], %146 {strides = array<i32>} : memref<2x16x2x128xf32, #tpu.memory_space<vmem>>, vector<1x1x2x128xf32>,
    %147 = arith.mulf %109, %1 : vector<2x128xf32>
    %148 = arith.mulf %112, %3 : vector<2x128xf32>
    %149 = arith.subf %147, %148 : vector<2x128xf32>
    %150 = arith.mulf %109, %3 : vector<2x128xf32>
    %151 = arith.mulf %112, %1 : vector<2x128xf32>
    %152 = arith.addf %150, %151 : vector<2x128xf32>
    %cst_129 = arith.constant -0.417223811 : f32
    %153 = vector.broadcast %cst_129 : f32 to vector<2x128xf32>
    %154 = arith.mulf %149, %153 : vector<2x128xf32>
    %cst_130 = arith.constant -0.417223811 : f32
    %155 = vector.broadcast %cst_130 : f32 to vector<2x128xf32>
    %156 = arith.mulf %152, %155 : vector<2x128xf32>
    %c0_131 = arith.constant 0 : index
    %c15 = arith.constant 15 : index
    %c0_132 = arith.constant 0 : index
    %c0_133 = arith.constant 0 : index
    %157 = vector.load %arg2[%c0_131, %c15, %c0_132, %c0_133] : memref<2x16x2x128xf32, #tpu.memory_space<vmem>>, vector<1x1x2x128xf32>
    %158 = vector.shape_cast %157 : vector<1x1x2x128xf32> to vector<2x128xf32>
    %159 = vector.shape_cast %154 : vector<2x128xf32> to vector<1x1x2x128xf32>
    tpu.vector_store %arg2[%c0_131, %c15, %c0_132, %c0_133], %159 {strides = array<i32>} : memref<2x16x2x128xf32, #tpu.memory_space<vmem>>, vector<1x1x2x128xf32>,
    %c1_134 = arith.constant 1 : index
    %c15_135 = arith.constant 15 : index
    %c0_136 = arith.constant 0 : index
    %c0_137 = arith.constant 0 : index
    %160 = vector.load %arg2[%c1_134, %c15_135, %c0_136, %c0_137] : memref<2x16x2x128xf32, #tpu.memory_space<vmem>>, vector<1x1x2x128xf32>
    %161 = vector.shape_cast %160 : vector<1x1x2x128xf32> to vector<2x128xf32>
    %162 = vector.shape_cast %156 : vector<2x128xf32> to vector<1x1x2x128xf32>
    tpu.vector_store %arg2[%c1_134, %c15_135, %c0_136, %c0_137], %162 {strides = array<i32>} : memref<2x16x2x128xf32, #tpu.memory_space<vmem>>, vector<1x1x2x128xf32>,
    %cst_138 = arith.constant 0.000000e+00 : f32
    %163 = vector.broadcast %cst_138 : f32 to vector<2x128xf32>
    %164 = arith.subf %163, %154 : vector<2x128xf32>
    %c0_139 = arith.constant 0 : index
    %c9 = arith.constant 9 : index
    %c0_140 = arith.constant 0 : index
    %c0_141 = arith.constant 0 : index
    %165 = vector.load %arg2[%c0_139, %c9, %c0_140, %c0_141] : memref<2x16x2x128xf32, #tpu.memory_space<vmem>>, vector<1x1x2x128xf32>
    %166 = vector.shape_cast %165 : vector<1x1x2x128xf32> to vector<2x128xf32>
    %167 = vector.shape_cast %164 : vector<2x128xf32> to vector<1x1x2x128xf32>
    tpu.vector_store %arg2[%c0_139, %c9, %c0_140, %c0_141], %167 {strides = array<i32>} : memref<2x16x2x128xf32, #tpu.memory_space<vmem>>, vector<1x1x2x128xf32>,
    %c1_142 = arith.constant 1 : index
    %c9_143 = arith.constant 9 : index
    %c0_144 = arith.constant 0 : index
    %c0_145 = arith.constant 0 : index
    %168 = vector.load %arg2[%c1_142, %c9_143, %c0_144, %c0_145] : memref<2x16x2x128xf32, #tpu.memory_space<vmem>>, vector<1x1x2x128xf32>
    %169 = vector.shape_cast %168 : vector<1x1x2x128xf32> to vector<2x128xf32>
    %170 = vector.shape_cast %156 : vector<2x128xf32> to vector<1x1x2x128xf32>
    tpu.vector_store %arg2[%c1_142, %c9_143, %c0_144, %c0_145], %170 {strides = array<i32>} : memref<2x16x2x128xf32, #tpu.memory_space<vmem>>, vector<1x1x2x128xf32>,
    return
  }
  func.func @transform_0(%arg0: i32) -> (i32, i32, i32) {
    %c0_i32 = arith.constant 0 : i32
    %c0_i32_0 = arith.constant 0 : i32
    %c0_i32_1 = arith.constant 0 : i32
    return %c0_i32, %arg0, %c0_i32_0 : i32, i32, i32
  }
  func.func @transform_1(%arg0: i32) -> (i32, i32, i32, i32) {
    %c0_i32 = arith.constant 0 : i32
    %c0_i32_0 = arith.constant 0 : i32
    %c0_i32_1 = arith.constant 0 : i32
    %c0_i32_2 = arith.constant 0 : i32
    return %c0_i32, %c0_i32_0, %arg0, %c0_i32_1 : i32, i32, i32, i32
  }
}

</mosaic_0001>

<llo_original>
// kernel: tpu_custom_call.1
$region0: #{tpu_custom_call.1}
  #allocation0 [shape = 'u32[]', space=smem, size = 0x4, offset = 0x4, fixed_abs, tag = 'smem constant byte address 0x4 - core index']
  #allocation1 [shape = 'u32[144,128]{1,0:T(1,128)}', space=vmem, size = 0x12000, scoped, tag = 'internal scratch']
  %s0 = inlined_call_operand.hbm [shape: f32[3,2,128], index: 0, kind: input, shape index: {}]
  %s1 = inlined_call_operand.hbm [shape: f32[2,16,2,128], index: 1, kind: output, shape index: {}]
  %s2 = sld [smem:[#allocation0]]
  $region18: #{tpu_custom_call.1} parent=0
    _
  %s4 = ssub.s32 1, %s2
  %s5 = scalar_select 0, %s4, %s2
  $region1: #{tpu_custom_call.1} parent=0
    #allocation2 [shape = 'u8[3072]{0}', space=vmem, size = 0xc00, scoped, tag = 'input window, operand 0, single buffered']
    #allocation3 [shape = 's32[1]{0}', space=sflag, size = 0x4, scoped, tag = 'scoped memory for tpu_custom_call.1']
    #allocation4 [shape = 's32[1]{0}', space=sflag, size = 0x4, scoped, tag = 'scoped memory for tpu_custom_call.1']
    #allocation5 [shape = 'u8[32768]{0}', space=vmem, size = 0x8000, scoped, tag = 'output window, operand 0, single buffered']
    %6 = vsyncpa [#allocation3], 0
    %7 = vsyncpa [#allocation4], 0
    // Predicated region
    $region2: #{tpu_custom_call.1} parent=1 // pred_check
      _
    $region3: #{tpu_custom_call.1} parent=1 // pred_check_branch
      %9 = sbr.rel (0) target = $region5
    $region4: #{tpu_custom_call.1} parent=1 // pred_region
      %s11 = ssub.s32 96, 96
      %12 = vsyncadd [#allocation3], %s11
      %s13 = sshll.u32 [#allocation2], 4
      %s14 = int_to_ptr.vmem [resolvable:$true] %s13
      %19 = dma.hbm_to_vmem [thread:$0]  %s0, 96, %s14, [#allocation3], 32, 32, 2
    $region5: #{tpu_custom_call.1} parent=1 // pred_fallthru
      _
    // Predicated region
    $region6: #{tpu_custom_call.1} parent=1 // pred_check
      _
    $region7: #{tpu_custom_call.1} parent=1 // pred_check_branch
      %21 = sbr.rel (0) target = $region9
    $region8: #{tpu_custom_call.1} parent=1 // pred_region
      %22 = dma.done [#allocation3], 96
    $region9: #{tpu_custom_call.1} parent=1 // pred_fallthru
      _
    %v23 = vld [vmem:[#allocation2] sm:$0x3]
    %s24 = scalar_lea.vmem [#allocation2], 2
    %v25 = vld [vmem:[%s24] sm:$0x3]
    %s26 = scalar_lea.vmem [#allocation2], 4
    %v27 = vld [vmem:[%s26] sm:$0x3]
    %v28 = vmul.f32 %v27, 0.48860252
    %v29 = vmul.f32 %v27, %v28
    %v30 = vadd.f32 %v29, -0.1628675
    %v31 = vmul.f32 %v30, 1.9364917
    %v32 = vmul.f32 %v27, -0.7725484
    %v33 = vmul.f32 %v27, %v31
    %v34 = vmul.f32 %v28, -0.5163978
    %v35 = vadd.f32 %v33, %v34
    %v36 = vmul.f32 %v35, 1.9720266
    %v37 = vmul.f32 %v27, %v32
    %v38 = vadd.f32 %v37, 0.15450968
    %v39 = vmul.f32 %v38, 2.09165
    %v40 = vmul.f32 %v27, 1.0219855
    %41 = vst [vmem:[#allocation5] sm:$0x3] 0.2820948
    %s42 = scalar_lea.vmem [#allocation5], 32
    %43 = vst [vmem:[%s42] sm:$0x3] 0.0
    %s44 = scalar_lea.vmem [#allocation5], 4
    %45 = vst [vmem:[%s44] sm:$0x3] %v28
    %s46 = scalar_lea.vmem [#allocation5], 36
    %47 = vst [vmem:[%s46] sm:$0x3] 0.0
    %s48 = scalar_lea.vmem [#allocation5], 12
    %49 = vst [vmem:[%s48] sm:$0x3] %v31
    %s50 = scalar_lea.vmem [#allocation5], 44
    %51 = vst [vmem:[%s50] sm:$0x3] 0.0
    %s52 = scalar_lea.vmem [#allocation5], 24
    %53 = vst [vmem:[%s52] sm:$0x3] %v36
    %s54 = scalar_lea.vmem [#allocation5], 56
    %55 = vst [vmem:[%s54] sm:$0x3] 0.0
    %v56 = vmul.f32 %v23, -0.34549415
    %v57 = vmul.f32 %v25, -0.34549415
    %s58 = scalar_lea.vmem [#allocation5], 6
    %59 = vst [vmem:[%s58] sm:$0x3] %v56
    %s60 = scalar_lea.vmem [#allocation5], 38
    %61 = vst [vmem:[%s60] sm:$0x3] %v57
    %v62 = vsub.f32 0.0, %v56
    %s63 = scalar_lea.vmem [#allocation5], 2
    %64 = vst [vmem:[%s63] sm:$0x3] %v62
    %s65 = scalar_lea.vmem [#allocation5], 34
    %66 = vst [vmem:[%s65] sm:$0x3] %v57
    %v67 = vmul.f32 %v23, %v32
    %v68 = vmul.f32 %v25, %v32
    %s69 = scalar_lea.vmem [#allocation5], 14
    %70 = vst [vmem:[%s69] sm:$0x3] %v67
    %s71 = scalar_lea.vmem [#allocation5], 46
    %72 = vst [vmem:[%s71] sm:$0x3] %v68
    %v73 = vsub.f32 0.0, %v67
    %s74 = scalar_lea.vmem [#allocation5], 10
    %75 = vst [vmem:[%s74] sm:$0x3] %v73
    %s76 = scalar_lea.vmem [#allocation5], 42
    %77 = vst [vmem:[%s76] sm:$0x3] %v68
    %v78 = vmul.f32 %v23, %v39
    %v79 = vmul.f32 %v25, %v39
    %s80 = scalar_lea.vmem [#allocation5], 26
    %81 = vst [vmem:[%s80] sm:$0x3] %v78
    %s82 = scalar_lea.vmem [#allocation5], 58
    %83 = vst [vmem:[%s82] sm:$0x3] %v79
    %v84 = vsub.f32 0.0, %v78
    %s85 = scalar_lea.vmem [#allocation5], 22
    %86 = vst [vmem:[%s85] sm:$0x3] %v84
    %s87 = scalar_lea.vmem [#allocation5], 54
    %88 = vst [vmem:[%s87] sm:$0x3] %v79
    %v89 = vmul.f32 %v23, %v23
    %v90 = vmul.f32 %v25, %v25
    %v91 = vsub.f32 %v89, %v90
    %v92 = vmul.f32 %v23, %v25
    %v93 = vadd.f32 %v92, %v92
    %v94 = vmul.f32 %v91, 0.3862742
    %v95 = vmul.f32 %v93, 0.3862742
    %s96 = scalar_lea.vmem [#allocation5], 16
    %97 = vst [vmem:[%s96] sm:$0x3] %v94
    %s98 = scalar_lea.vmem [#allocation5], 48
    %99 = vst [vmem:[%s98] sm:$0x3] %v95
    %v100 = vsub.f32 0.0, %v95
    %s101 = scalar_lea.vmem [#allocation5], 8
    %102 = vst [vmem:[%s101] sm:$0x3] %v94
    %s103 = scalar_lea.vmem [#allocation5], 40
    %104 = vst [vmem:[%s103] sm:$0x3] %v100
    %v105 = vmul.f32 %v91, %v40
    %v106 = vmul.f32 %v93, %v40
    %s107 = scalar_lea.vmem [#allocation5], 28
    %108 = vst [vmem:[%s107] sm:$0x3] %v105
    %s109 = scalar_lea.vmem [#allocation5], 60
    %110 = vst [vmem:[%s109] sm:$0x3] %v106
    %v111 = vsub.f32 0.0, %v106
    %s112 = scalar_lea.vmem [#allocation5], 20
    %113 = vst [vmem:[%s112] sm:$0x3] %v105
    %s114 = scalar_lea.vmem [#allocation5], 52
    %115 = vst [vmem:[%s114] sm:$0x3] %v111
    %v116 = vmul.f32 %v91, %v23
    %v117 = vmul.f32 %v93, %v25
    %v118 = vsub.f32 %v116, %v117
    %v119 = vmul.f32 %v91, %v25
    %v120 = vmul.f32 %v93, %v23
    %v121 = vadd.f32 %v119, %v120
    %v122 = vmul.f32 %v118, -0.4172238
    %v123 = vmul.f32 %v121, -0.4172238
    %s124 = scalar_lea.vmem [#allocation5], 30
    %125 = vst [vmem:[%s124] sm:$0x3] %v122
    %s126 = scalar_lea.vmem [#allocation5], 62
    %127 = vst [vmem:[%s126] sm:$0x3] %v123
    %v128 = vsub.f32 0.0, %v122
    %s129 = scalar_lea.vmem [#allocation5], 18
    %130 = vst [vmem:[%s129] sm:$0x3] %v128
    %s131 = scalar_lea.vmem [#allocation5], 50
    %132 = vst [vmem:[%s131] sm:$0x3] %v123
    // Predicated region
    $region10: #{tpu_custom_call.1} parent=1 // pred_check
      _
    $region11: #{tpu_custom_call.1} parent=1 // pred_check_branch
      %134 = sbr.rel (0) target = $region13
    $region12: #{tpu_custom_call.1} parent=1 // pred_region
      %s136 = ssub.s32 1024, 1024
      %137 = vsyncadd [#allocation4], %s136
      %s138 = sshll.u32 [#allocation5], 4
      %s139 = int_to_ptr.vmem [resolvable:$true] %s138
      %144 = dma.vmem_to_hbm [thread:$0]  %s139, 1024, %s1, [#allocation4], 32, 32, 2
    $region13: #{tpu_custom_call.1} parent=1 // pred_fallthru
      _
    // Predicated region
    $region14: #{tpu_custom_call.1} parent=1 // pred_check
      _
    $region15: #{tpu_custom_call.1} parent=1 // pred_check_branch
      %146 = sbr.rel (0) target = $region17
    $region16: #{tpu_custom_call.1} parent=1 // pred_region
      %147 = dma.done [#allocation4], 1024
    $region17: #{tpu_custom_call.1} parent=1 // pred_fallthru
      _
    %148 = vsyncpa [#allocation3], 1
    %149 = vsyncpa [#allocation4], 1

</llo_original>
